<compile_context>
chip_gen: v6e
topology: v6e:2x2x1
jax: 0.10.0
libtpu: 0.0.40
codegen_flags: <defaults>
</compile_context>

<pallas_src>
import functools

import jax
import jax.numpy as jnp
from jax.experimental import pallas as pl
from jax.experimental.pallas import tpu as pltpu

_LANE = 128
_SUBLANE = 8


def _round_up(x, m):
    return (x + m - 1) // m * m


def _mlp_kernel(x_ref, w1_ref, b1_ref, w2_ref, b2_ref, w3_ref, b3_ref, o_ref):
    """fc1 -> relu -> fc2 -> relu -> fc3, fused in VMEM.

    Weights may be bf16 (full-rate MXU on v6e/v7x); accumulation is always f32
    and the bias-add / ReLU run in f32 on the VPU (safe on v5e too).
    """
    wdt = w1_ref.dtype
    x = x_ref[...].astype(wdt)
    h1 = jnp.dot(x, w1_ref[...], preferred_element_type=jnp.float32) + b1_ref[...]
    h1 = jnp.maximum(h1, 0.0).astype(wdt)
    h2 = jnp.dot(h1, w2_ref[...], preferred_element_type=jnp.float32) + b2_ref[...]
    h2 = jnp.maximum(h2, 0.0).astype(wdt)
    o_ref[...] = (
        jnp.dot(h2, w3_ref[...], preferred_element_type=jnp.float32) + b3_ref[...]
    ).astype(o_ref.dtype)


@functools.partial(jax.jit, static_argnames=("block_b", "weights_dtype"))
def normal_nn_forward(state, params, block_b=None, weights_dtype=jnp.float32):
    """Pallas forward pass of Normal_NN.

    state:  [B, state_size] float32
    params: dict of w1 [S,F1], b1 [1,F1], w2 [F1,F2], b2 [1,F2],
            w3 [F2,A], b3 [1,A]
    block_b:       batch tile (rows per grid step).  Defaults to
                   min(round_up(B, 8), 1024).  When B is large this keeps
                   >=2 grid steps so the 'parallel' axis can shard across
                   both TensorCores on v7x.
    weights_dtype: jnp.float32 or jnp.bfloat16 (bf16 recommended on v6e/v7x).
    returns [B, action_size] float32
    """
    w1, b1 = params["w1"], params["b1"]
    w2, b2 = params["w2"], params["b2"]
    w3, b3 = params["w3"], params["b3"]

    B, S = state.shape
    F1 = w1.shape[1]
    F2 = w2.shape[1]
    A = w3.shape[1]

    # ---- Lane-dense output: pad action dim to a multiple of 128 -------------
    A_pad = _round_up(A, _LANE)
    if A_pad != A:
        w3 = jnp.pad(w3, ((0, 0), (0, A_pad - A)))
        b3 = jnp.pad(b3, ((0, 0), (0, A_pad - A)))

    # ---- Large batch tile; pad B so it divides evenly ------------------------
    if block_b is None:
        block_b = min(_round_up(B, _SUBLANE), 1024)
    block_b = _round_up(block_b, _SUBLANE)
    B_pad = _round_up(B, block_b)
    if B_pad != B:
        state = jnp.pad(state, ((0, B_pad - B), (0, 0)))

    grid = (B_pad // block_b,)

    # ---- Optional bf16 weights for full-rate MXU (v6e/v7x) -------------------
    w1c = w1.astype(weights_dtype)
    w2c = w2.astype(weights_dtype)
    w3c = w3.astype(weights_dtype)

    itemsize = jnp.dtype(weights_dtype).itemsize
    flops = 2 * B_pad * (S * F1 + F1 * F2 + F2 * A_pad)
    bytes_accessed = (
        B_pad * S * 4
        + (S * F1 + F1 * F2 + F2 * A_pad) * itemsize
        + (F1 + F2 + A_pad) * 4
        + B_pad * A_pad * 4
    )

    out = pl.pallas_call(
        _mlp_kernel,
        out_shape=jax.ShapeDtypeStruct((B_pad, A_pad), jnp.float32),
        grid_spec=pl.GridSpec(
            grid=grid,
            in_specs=[
                pl.BlockSpec((block_b, S), lambda i: (i, 0)),    # state tile
                # Weights/biases: constant index_map -> fetched once, resident.
                pl.BlockSpec((S, F1), lambda i: (0, 0)),         # w1
                pl.BlockSpec((1, F1), lambda i: (0, 0)),         # b1
                pl.BlockSpec((F1, F2), lambda i: (0, 0)),        # w2
                pl.BlockSpec((1, F2), lambda i: (0, 0)),         # b2
                pl.BlockSpec((F2, A_pad), lambda i: (0, 0)),     # w3 (padded)
                pl.BlockSpec((1, A_pad), lambda i: (0, 0)),      # b3 (padded)
            ],
            out_specs=pl.BlockSpec((block_b, A_pad), lambda i: (i, 0)),
        ),
        compiler_params=pltpu.CompilerParams(
            dimension_semantics=("parallel",),
        ),
        cost_estimate=pl.CostEstimate(
            flops=flops, transcendentals=0, bytes_accessed=bytes_accessed
        ),
    )(state, w1c, b1, w2c, b2, w3c, b3)

    return out[:B, :A]


def init_params(key, state_size, action_size, fc1_units=64, fc2_units=64):
    """Deterministic PyTorch-Linear-style uniform init."""
    keys = jax.random.split(key, 6)

    def linear(kw, kb, fan_in, fan_out):
        bound = 1.0 / jnp.sqrt(fan_in)
        w = jax.random.uniform(kw, (fan_in, fan_out), jnp.float32, -bound, bound)
        b = jax.random.uniform(kb, (1, fan_out), jnp.float32, -bound, bound)
        return w, b

    w1, b1 = linear(keys[0], keys[1], state_size, fc1_units)
    w2, b2 = linear(keys[2], keys[3], fc1_units, fc2_units)
    w3, b3 = linear(keys[4], keys[5], fc2_units, action_size)
    return {"w1": w1, "b1": b1, "w2": w2, "b2": b2, "w3": w3, "b3": b3}


def _reference_forward(state, params):
    h1 = jnp.maximum(state @ params["w1"] + params["b1"], 0.0)
    h2 = jnp.maximum(h1 @ params["w2"] + params["b2"], 0.0)
    return h2 @ params["w3"] + params["b3"]


if __name__ == "__main__":
    key = jax.random.PRNGKey(0)
    k_params, k_state, k_state2 = jax.random.split(key, 3)

    batch = 8
    state_size = 8
    action_size = 4

    params = init_params(k_params, state_size, action_size)
    state = jax.random.normal(k_state, (batch, state_size), jnp.float32)

    # f32 path, tight check against the JAX reference.
    out = normal_nn_forward(state, params)
    out = jax.block_until_ready(out)
    ref = _reference_forward(state, params)
    assert out.shape == (batch, action_size)
    assert jnp.allclose(out, ref, atol=1e-5, rtol=1e-5), "mismatch vs JAX reference"

    # Non-multiple-of-tile batch exercises the padding/slicing path.
    state_odd = jax.random.normal(k_state2, (13, state_size), jnp.float32)
    out_odd = jax.block_until_ready(normal_nn_forward(state_odd, params))
    ref_odd = _reference_forward(state_odd, params)
    assert out_odd.shape == (13, action_size)
    assert jnp.allclose(out_odd, ref_odd, atol=1e-5, rtol=1e-5), "padded-batch mismatch"

    # bf16 MXU path (v6e/v7x fast path), loose tolerance.
    out_bf16 = jax.block_until_ready(
        normal_nn_forward(state, params, weights_dtype=jnp.bfloat16)
    )
    assert jnp.allclose(out_bf16, ref, atol=1e-1, rtol=1e-1), "bf16 path mismatch"

    print("KERNEL_OK")
</pallas_src>

<mosaic_0001>
module attributes {stable_mosaic.version = 11 : i64} {
  func.func @_mlp_kernel(%arg0: i32, %arg1: memref<8x8xf32, #tpu.memory_space<vmem>>, %arg2: memref<8x64xf32, #tpu.memory_space<vmem>>, %arg3: memref<1x64xf32, #tpu.memory_space<vmem>>, %arg4: memref<64x64xf32, #tpu.memory_space<vmem>>, %arg5: memref<1x64xf32, #tpu.memory_space<vmem>>, %arg6: memref<64x128xf32, #tpu.memory_space<vmem>>, %arg7: memref<1x128xf32, #tpu.memory_space<vmem>>, %arg8: memref<8x128xf32, #tpu.memory_space<vmem>>) attributes {dimension_semantics = [#tpu.dimension_semantics<parallel>], iteration_bounds = array<i64: 1>, scalar_prefetch = 0 : i64, scratch_operands = 0 : i64, tpu.core_type = #tpu.core_type<tc>, window_params = [{transform_indices = @transform_0, window_bounds = array<i64: 8, 8>}, {pipeline_mode = #tpu.pipeline_mode<synchronous>, transform_indices = @transform_1, window_bounds = array<i64: 8, 64>}, {pipeline_mode = #tpu.pipeline_mode<synchronous>, transform_indices = @transform_2, window_bounds = array<i64: 1, 64>}, {pipeline_mode = #tpu.pipeline_mode<synchronous>, transform_indices = @transform_3, window_bounds = array<i64: 64, 64>}, {pipeline_mode = #tpu.pipeline_mode<synchronous>, transform_indices = @transform_4, window_bounds = array<i64: 1, 64>}, {pipeline_mode = #tpu.pipeline_mode<synchronous>, transform_indices = @transform_5, window_bounds = array<i64: 64, 128>}, {pipeline_mode = #tpu.pipeline_mode<synchronous>, transform_indices = @transform_6, window_bounds = array<i64: 1, 128>}, {transform_indices = @transform_7, window_bounds = array<i64: 8, 128>}]} {
    %c0 = arith.constant 0 : index
    %c0_0 = arith.constant 0 : index
    %0 = vector.load %arg1[%c0, %c0_0] : memref<8x8xf32, #tpu.memory_space<vmem>>, vector<8x8xf32>
    %c0_1 = arith.constant 0 : index
    %c0_2 = arith.constant 0 : index
    %1 = vector.load %arg2[%c0_1, %c0_2] : memref<8x64xf32, #tpu.memory_space<vmem>>, vector<8x64xf32>
    %cst = arith.constant dense<0.000000e+00> : vector<8x64xf32>
    %2 = tpu.matmul %0, %1, %cst {dimension_numbers = #tpu.dot_dimension_numbers<[1], [0], [0], [1], [0, 0, 1, 1], [], []>} : vector<8x8xf32>, vector<8x64xf32>, vector<8x64xf32> -> vector<8x64xf32>
    %c0_3 = arith.constant 0 : index
    %c0_4 = arith.constant 0 : index
    %3 = vector.load %arg3[%c0_3, %c0_4] : memref<1x64xf32, #tpu.memory_space<vmem>>, vector<1x64xf32>
    %4 = vector.broadcast %3 : vector<1x64xf32> to vector<8x64xf32>
    %5 = arith.addf %2, %4 : vector<8x64xf32>
    %cst_5 = arith.constant 0.000000e+00 : f32
    %6 = vector.broadcast %cst_5 : f32 to vector<8x64xf32>
    %7 = arith.maximumf %5, %6 : vector<8x64xf32>
    %c0_6 = arith.constant 0 : index
    %c0_7 = arith.constant 0 : index
    %8 = vector.load %arg4[%c0_6, %c0_7] : memref<64x64xf32, #tpu.memory_space<vmem>>, vector<64x64xf32>
    %cst_8 = arith.constant dense<0.000000e+00> : vector<8x64xf32>
    %9 = tpu.matmul %7, %8, %cst_8 {dimension_numbers = #tpu.dot_dimension_numbers<[1], [0], [0], [1], [0, 0, 1, 1], [], []>} : vector<8x64xf32>, vector<64x64xf32>, vector<8x64xf32> -> vector<8x64xf32>
    %c0_9 = arith.constant 0 : index
    %c0_10 = arith.constant 0 : index
    %10 = vector.load %arg5[%c0_9, %c0_10] : memref<1x64xf32, #tpu.memory_space<vmem>>, vector<1x64xf32>
    %11 = vector.broadcast %10 : vector<1x64xf32> to vector<8x64xf32>
    %12 = arith.addf %9, %11 : vector<8x64xf32>
    %cst_11 = arith.constant 0.000000e+00 : f32
    %13 = vector.broadcast %cst_11 : f32 to vector<8x64xf32>
    %14 = arith.maximumf %12, %13 : vector<8x64xf32>
    %c0_12 = arith.constant 0 : index
    %c0_13 = arith.constant 0 : index
    %15 = vector.load %arg6[%c0_12, %c0_13] : memref<64x128xf32, #tpu.memory_space<vmem>>, vector<64x128xf32>
    %cst_14 = arith.constant dense<0.000000e+00> : vector<8x128xf32>
    %16 = tpu.matmul %14, %15, %cst_14 {dimension_numbers = #tpu.dot_dimension_numbers<[1], [0], [0], [1], [0, 0, 1, 1], [], []>} : vector<8x64xf32>, vector<64x128xf32>, vector<8x128xf32> -> vector<8x128xf32>
    %c0_15 = arith.constant 0 : index
    %c0_16 = arith.constant 0 : index
    %17 = vector.load %arg7[%c0_15, %c0_16] : memref<1x128xf32, #tpu.memory_space<vmem>>, vector<1x128xf32>
    %18 = vector.broadcast %17 : vector<1x128xf32> to vector<8x128xf32>
    %19 = arith.addf %16, %18 : vector<8x128xf32>
    %c0_17 = arith.constant 0 : index
    %c0_18 = arith.constant 0 : index
    %20 = vector.load %arg8[%c0_17, %c0_18] : memref<8x128xf32, #tpu.memory_space<vmem>>, vector<8x128xf32>
    tpu.vector_store %arg8[%c0_17, %c0_18], %19 {strides = array<i32>} : memref<8x128xf32, #tpu.memory_space<vmem>>, vector<8x128xf32>,
    return
  }
  func.func @transform_0(%arg0: i32) -> (i32, i32) {
    %c0_i32 = arith.constant 0 : i32
    %c0_i32_0 = arith.constant 0 : i32
    return %arg0, %c0_i32 : i32, i32
  }
  func.func @transform_1(%arg0: i32) -> (i32, i32) {
    %c0_i32 = arith.constant 0 : i32
    %c0_i32_0 = arith.constant 0 : i32
    %c0_i32_1 = arith.constant 0 : i32
    return %c0_i32, %c0_i32_0 : i32, i32
  }
  func.func @transform_2(%arg0: i32) -> (i32, i32) {
    %c0_i32 = arith.constant 0 : i32
    %c0_i32_0 = arith.constant 0 : i32
    %c0_i32_1 = arith.constant 0 : i32
    return %c0_i32, %c0_i32_0 : i32, i32
  }
  func.func @transform_3(%arg0: i32) -> (i32, i32) {
    %c0_i32 = arith.constant 0 : i32
    %c0_i32_0 = arith.constant 0 : i32
    %c0_i32_1 = arith.constant 0 : i32
    return %c0_i32, %c0_i32_0 : i32, i32
  }
  func.func @transform_4(%arg0: i32) -> (i32, i32) {
    %c0_i32 = arith.constant 0 : i32
    %c0_i32_0 = arith.constant 0 : i32
    %c0_i32_1 = arith.constant 0 : i32
    return %c0_i32, %c0_i32_0 : i32, i32
  }
  func.func @transform_5(%arg0: i32) -> (i32, i32) {
    %c0_i32 = arith.constant 0 : i32
    %c0_i32_0 = arith.constant 0 : i32
    %c0_i32_1 = arith.constant 0 : i32
    return %c0_i32, %c0_i32_0 : i32, i32
  }
  func.func @transform_6(%arg0: i32) -> (i32, i32) {
    %c0_i32 = arith.constant 0 : i32
    %c0_i32_0 = arith.constant 0 : i32
    %c0_i32_1 = arith.constant 0 : i32
    return %c0_i32, %c0_i32_0 : i32, i32
  }
  func.func @transform_7(%arg0: i32) -> (i32, i32) {
    %c0_i32 = arith.constant 0 : i32
    %c0_i32_0 = arith.constant 0 : i32
    return %arg0, %c0_i32 : i32, i32
  }
}

</mosaic_0001>

<llo_original>
// kernel: normal_nn_forward.1
$region0: #{normal_nn_forward.1}
  #allocation0 [shape = 'u32[]', space=smem, size = 0x4, offset = 0x4, fixed_abs, tag = 'smem constant byte address 0x4 - core index']
  #allocation1 [shape = 'u32[144,128]{1,0:T(1,128)}', space=vmem, size = 0x12000, scoped, tag = 'internal scratch']
  %s0 = inlined_call_operand.vmem [shape: f32[8,8], index: 0, kind: input, shape index: {}]
  %s1 = inlined_call_operand.vmem [shape: f32[8,64], index: 1, kind: input, shape index: {}]
  %s2 = inlined_call_operand.vmem [shape: f32[1,64], index: 2, kind: input, shape index: {}]
  %s3 = inlined_call_operand.vmem [shape: f32[64,64], index: 3, kind: input, shape index: {}]
  %s4 = inlined_call_operand.vmem [shape: f32[1,64], index: 4, kind: input, shape index: {}]
  %s5 = inlined_call_operand.vmem [shape: f32[64,128], index: 5, kind: input, shape index: {}]
  %s6 = inlined_call_operand.vmem [shape: f32[1,128], index: 6, kind: input, shape index: {}]
  %s7 = inlined_call_operand.vmem [shape: f32[8,128], index: 7, kind: output, shape index: {}]
  %s8 = sld [smem:[#allocation0]]
  $region38: #{normal_nn_forward.1} parent=0
    _
  %s10 = ssub.s32 1, %s8
  %s11 = scalar_select 0, %s10, %s8
  // Predicated region
  $region2: #{normal_nn_forward.1} parent=0 // pred_check
    _
  $region3: #{normal_nn_forward.1} parent=0 // pred_check_branch
    %13 = sbr.rel (0) target = $region5
  $region4: #{normal_nn_forward.1} parent=0 // pred_region
    _
  $region5: #{normal_nn_forward.1} parent=0 // pred_fallthru
    _
  // Predicated region
  $region6: #{normal_nn_forward.1} parent=0 // pred_check
    _
  $region7: #{normal_nn_forward.1} parent=0 // pred_check_branch
    %15 = sbr.rel (0) target = $region9
  $region8: #{normal_nn_forward.1} parent=0 // pred_region
    _
  $region9: #{normal_nn_forward.1} parent=0 // pred_fallthru
    _
  // Predicated region
  $region10: #{normal_nn_forward.1} parent=0 // pred_check
    _
  $region11: #{normal_nn_forward.1} parent=0 // pred_check_branch
    %17 = sbr.rel (0) target = $region13
  $region12: #{normal_nn_forward.1} parent=0 // pred_region
    _
  $region13: #{normal_nn_forward.1} parent=0 // pred_fallthru
    _
  // Predicated region
  $region14: #{normal_nn_forward.1} parent=0 // pred_check
    _
  $region15: #{normal_nn_forward.1} parent=0 // pred_check_branch
    %19 = sbr.rel (0) target = $region17
  $region16: #{normal_nn_forward.1} parent=0 // pred_region
    _
  $region17: #{normal_nn_forward.1} parent=0 // pred_fallthru
    _
  // Predicated region
  $region18: #{normal_nn_forward.1} parent=0 // pred_check
    _
  $region19: #{normal_nn_forward.1} parent=0 // pred_check_branch
    %21 = sbr.rel (0) target = $region21
  $region20: #{normal_nn_forward.1} parent=0 // pred_region
    _
  $region21: #{normal_nn_forward.1} parent=0 // pred_fallthru
    _
  // Predicated region
  $region22: #{normal_nn_forward.1} parent=0 // pred_check
    _
  $region23: #{normal_nn_forward.1} parent=0 // pred_check_branch
    %23 = sbr.rel (0) target = $region25
  $region24: #{normal_nn_forward.1} parent=0 // pred_region
    _
  $region25: #{normal_nn_forward.1} parent=0 // pred_fallthru
    _
  // Predicated region
  $region26: #{normal_nn_forward.1} parent=0 // pred_check
    _
  $region27: #{normal_nn_forward.1} parent=0 // pred_check_branch
    %25 = sbr.rel (0) target = $region29
  $region28: #{normal_nn_forward.1} parent=0 // pred_region
    _
  $region29: #{normal_nn_forward.1} parent=0 // pred_fallthru
    _
  %v26 = vld [vmem:[%s0] sm:$0xff]
  %v27 = vld [vmem:[%s1] sm:$0xff]
  %v28 = vld [vmem:[%s2] sm:$0x1]
  %v30 = vlaneseq
  %v31 = vshrl.u32 %v30, 7
  %v32 = vsub.s32 0, %v31
  %v33 = vrot.slane %v28, %v32
  %vm35 = vcmask 64512
  %v37 = vsel %vm35, %v26, 0
  %39 = vmatprep.subr.mxu0 0.0
  %40 = vmatpush1.msra.mxu0 0.0
  %41 = vmatprep.subr.mxu0 0.0
  %42 = vmatpush1.msra.mxu0 0.0
  %43 = vmatprep.subr.mxu0 0.0
  %44 = vmatpush1.msra.mxu0 0.0
  %45 = vmatprep.subr.mxu0 0.0
  %46 = vmatpush1.msra.mxu0 0.0
  %47 = vmatprep.subr.mxu0 0.0
  %48 = vmatpush1.msra.mxu0 0.0
  %49 = vmatprep.subr.mxu0 0.0
  %50 = vmatpush1.msra.mxu0 0.0
  %51 = vmatprep.subr.mxu0 0.0
  %52 = vmatpush1.msra.mxu0 0.0
  %53 = vmatprep.subr.mxu0 0.0
  %54 = vmatpush1.msra.mxu0 0.0
  %55 = vmatprep.subr.mxu0 0.0
  %56 = vmatpush1.msra.mxu0 0.0
  %57 = vmatprep.subr.mxu0 0.0
  %58 = vmatpush1.msra.mxu0 0.0
  %59 = vmatprep.subr.mxu0 0.0
  %60 = vmatpush1.msra.mxu0 0.0
  %61 = vmatprep.subr.mxu0 0.0
  %62 = vmatpush1.msra.mxu0 0.0
  %63 = vmatprep.subr.mxu0 0.0
  %64 = vmatpush1.msra.mxu0 0.0
  %65 = vmatprep.subr.mxu0 0.0
  %66 = vmatpush1.msra.mxu0 0.0
  %67 = vmatprep.subr.mxu0 0.0
  %68 = vmatpush1.msra.mxu0 0.0
  %69 = vmatprep.subr.mxu0 0.0
  %70 = vmatpush1.msra.mxu0 %v27
  %71 = vmatprep.subr.mxu0 0.0
  %72 = vmatpush2.msra.mxu0 0.0
  %73 = vmatprep.subr.mxu0 0.0
  %74 = vmatpush2.msra.mxu0 0.0
  %75 = vmatprep.subr.mxu0 0.0
  %76 = vmatpush2.msra.mxu0 0.0
  %77 = vmatprep.subr.mxu0 0.0
  %78 = vmatpush2.msra.mxu0 0.0
  %79 = vmatprep.subr.mxu0 0.0
  %80 = vmatpush2.msra.mxu0 0.0
  %81 = vmatprep.subr.mxu0 0.0
  %82 = vmatpush2.msra.mxu0 0.0
  %83 = vmatprep.subr.mxu0 0.0
  %84 = vmatpush2.msra.mxu0 0.0
  %85 = vmatprep.subr.mxu0 0.0
  %86 = vmatpush2.msra.mxu0 0.0
  %87 = vmatprep.subr.mxu0 0.0
  %88 = vmatpush2.msra.mxu0 0.0
  %89 = vmatprep.subr.mxu0 0.0
  %90 = vmatpush2.msra.mxu0 0.0
  %91 = vmatprep.subr.mxu0 0.0
  %92 = vmatpush2.msra.mxu0 0.0
  %93 = vmatprep.subr.mxu0 0.0
  %94 = vmatpush2.msra.mxu0 0.0
  %95 = vmatprep.subr.mxu0 0.0
  %96 = vmatpush2.msra.mxu0 0.0
  %97 = vmatprep.subr.mxu0 0.0
  %98 = vmatpush2.msra.mxu0 0.0
  %99 = vmatprep.subr.mxu0 0.0
  %100 = vmatpush2.msra.mxu0 0.0
  %101 = vmatprep.subr.mxu0 0.0
  %102 = vmatpush2.msra.mxu0 0.0
  %103 = vmatprep.mubr.f32.mxu0 0.0
  %104 = vmatmul.mubr.f32.gmra.mxu0 %v37
  %v105 = vpop.f32.mrf.mxu0
  %v106 = vadd.f32 %v33, %v105
  %v107 = vpop.f32.mrf.mxu0
  %108 = vdwg.mxu0
  %v109 = vmax.f32 %v106, 0.0
  %v110 = vld [vmem:[%s3] sm:$0xff]
  %v111 = vld [vmem:[%s3 + $0x8] sm:$0xff]
  %v112 = vld [vmem:[%s3 + $0x10] sm:$0xff]
  %v113 = vld [vmem:[%s3 + $0x18] sm:$0xff]
  %v114 = vld [vmem:[%s3 + $0x20] sm:$0xff]
  %v115 = vld [vmem:[%s3 + $0x28] sm:$0xff]
  %v116 = vld [vmem:[%s3 + $0x30] sm:$0xff]
  %v117 = vld [vmem:[%s3 + $0x38] sm:$0xff]
  %v118 = vld [vmem:[%s4] sm:$0x1]
  %v120 = vlaneseq
  %v121 = vshrl.u32 %v120, 7
  %v122 = vsub.s32 0, %v121
  %v123 = vrot.slane %v118, %v122
  %vm125 = vcmask 523264
  %v127 = vsel %vm125, %v109, 0
  %129 = vmatprep.subr.mxu0 0.0
  %130 = vmatpush1.msra.mxu0 0.0
  %131 = vmatprep.subr.mxu0 0.0
  %132 = vmatpush1.msra.mxu0 0.0
  %133 = vmatprep.subr.mxu0 0.0
  %134 = vmatpush1.msra.mxu0 0.0
  %135 = vmatprep.subr.mxu0 0.0
  %136 = vmatpush1.msra.mxu0 0.0
  %137 = vmatprep.subr.mxu0 0.0
  %138 = vmatpush1.msra.mxu0 0.0
  %139 = vmatprep.subr.mxu0 0.0
  %140 = vmatpush1.msra.mxu0 0.0
  %141 = vmatprep.subr.mxu0 0.0
  %142 = vmatpush1.msra.mxu0 0.0
  %143 = vmatprep.subr.mxu0 0.0
  %144 = vmatpush1.msra.mxu0 0.0
  %145 = vmatprep.subr.mxu0 0.0
  %146 = vmatpush1.msra.mxu0 %v117
  %147 = vmatprep.subr.mxu0 0.0
  %148 = vmatpush1.msra.mxu0 %v116
  %149 = vmatprep.subr.mxu0 0.0
  %150 = vmatpush1.msra.mxu0 %v115
  %151 = vmatprep.subr.mxu0 0.0
  %152 = vmatpush1.msra.mxu0 %v114
  %153 = vmatprep.subr.mxu0 0.0
  %154 = vmatpush1.msra.mxu0 %v113
  %155 = vmatprep.subr.mxu0 0.0
  %156 = vmatpush1.msra.mxu0 %v112
  %157 = vmatprep.subr.mxu0 0.0
  %158 = vmatpush1.msra.mxu0 %v111
  %159 = vmatprep.subr.mxu0 0.0
  %160 = vmatpush1.msra.mxu0 %v110
  %161 = vmatprep.subr.mxu0 0.0
  %162 = vmatpush2.msra.mxu0 0.0
  %163 = vmatprep.subr.mxu0 0.0
  %164 = vmatpush2.msra.mxu0 0.0
  %165 = vmatprep.subr.mxu0 0.0
  %166 = vmatpush2.msra.mxu0 0.0
  %167 = vmatprep.subr.mxu0 0.0
  %168 = vmatpush2.msra.mxu0 0.0
  %169 = vmatprep.subr.mxu0 0.0
  %170 = vmatpush2.msra.mxu0 0.0
  %171 = vmatprep.subr.mxu0 0.0
  %172 = vmatpush2.msra.mxu0 0.0
  %173 = vmatprep.subr.mxu0 0.0
  %174 = vmatpush2.msra.mxu0 0.0
  %175 = vmatprep.subr.mxu0 0.0
  %176 = vmatpush2.msra.mxu0 0.0
  %177 = vmatprep.subr.mxu0 0.0
  %178 = vmatpush2.msra.mxu0 0.0
  %179 = vmatprep.subr.mxu0 0.0
  %180 = vmatpush2.msra.mxu0 0.0
  %181 = vmatprep.subr.mxu0 0.0
  %182 = vmatpush2.msra.mxu0 0.0
  %183 = vmatprep.subr.mxu0 0.0
  %184 = vmatpush2.msra.mxu0 0.0
  %185 = vmatprep.subr.mxu0 0.0
  %186 = vmatpush2.msra.mxu0 0.0
  %187 = vmatprep.subr.mxu0 0.0
  %188 = vmatpush2.msra.mxu0 0.0
  %189 = vmatprep.subr.mxu0 0.0
  %190 = vmatpush2.msra.mxu0 0.0
  %191 = vmatprep.subr.mxu0 0.0
  %192 = vmatpush2.msra.mxu0 0.0
  %193 = vmatprep.mubr.f32.mxu0 0.0
  %194 = vmatmul.mubr.f32.gmra.mxu0 %v127
  %v195 = vpop.f32.mrf.mxu0
  %v196 = vadd.f32 %v123, %v195
  %v197 = vpop.f32.mrf.mxu0
  %198 = vdwg.mxu0
  %v199 = vmax.f32 %v196, 0.0
  %v200 = vld [vmem:[%s5] sm:$0xff]
  %v201 = vld [vmem:[%s5 + $0x8] sm:$0xff]
  %v202 = vld [vmem:[%s5 + $0x10] sm:$0xff]
  %v203 = vld [vmem:[%s5 + $0x18] sm:$0xff]
  %v204 = vld [vmem:[%s5 + $0x20] sm:$0xff]
  %v205 = vld [vmem:[%s5 + $0x28] sm:$0xff]
  %v206 = vld [vmem:[%s5 + $0x30] sm:$0xff]
  %v207 = vld [vmem:[%s5 + $0x38] sm:$0xff]
  %v208 = vld [vmem:[%s6] sm:$0x1]
  %v210 = vlaneseq
  %v211 = vshrl.u32 %v210, 7
  %v212 = vsub.s32 0, %v211
  %v213 = vrot.slane %v208, %v212
  %v216 = vsel %vm125, %v199, 0
  %218 = vmatprep.subr.mxu0 0.0
  %219 = vmatpush1.msra.mxu0 0.0
  %220 = vmatprep.subr.mxu0 0.0
  %221 = vmatpush1.msra.mxu0 0.0
  %222 = vmatprep.subr.mxu0 0.0
  %223 = vmatpush1.msra.mxu0 0.0
  %224 = vmatprep.subr.mxu0 0.0
  %225 = vmatpush1.msra.mxu0 0.0
  %226 = vmatprep.subr.mxu0 0.0
  %227 = vmatpush1.msra.mxu0 0.0
  %228 = vmatprep.subr.mxu0 0.0
  %229 = vmatpush1.msra.mxu0 0.0
  %230 = vmatprep.subr.mxu0 0.0
  %231 = vmatpush1.msra.mxu0 0.0
  %232 = vmatprep.subr.mxu0 0.0
  %233 = vmatpush1.msra.mxu0 0.0
  %234 = vmatprep.subr.mxu0 0.0
  %235 = vmatpush1.msra.mxu0 %v207
  %236 = vmatprep.subr.mxu0 0.0
  %237 = vmatpush1.msra.mxu0 %v206
  %238 = vmatprep.subr.mxu0 0.0
  %239 = vmatpush1.msra.mxu0 %v205
  %240 = vmatprep.subr.mxu0 0.0
  %241 = vmatpush1.msra.mxu0 %v204
  %242 = vmatprep.subr.mxu0 0.0
  %243 = vmatpush1.msra.mxu0 %v203
  %244 = vmatprep.subr.mxu0 0.0
  %245 = vmatpush1.msra.mxu0 %v202
  %246 = vmatprep.subr.mxu0 0.0
  %247 = vmatpush1.msra.mxu0 %v201
  %248 = vmatprep.subr.mxu0 0.0
  %249 = vmatpush1.msra.mxu0 %v200
  %250 = vmatprep.subr.mxu0 0.0
  %251 = vmatpush2.msra.mxu0 0.0
  %252 = vmatprep.subr.mxu0 0.0
  %253 = vmatpush2.msra.mxu0 0.0
  %254 = vmatprep.subr.mxu0 0.0
  %255 = vmatpush2.msra.mxu0 0.0
  %256 = vmatprep.subr.mxu0 0.0
  %257 = vmatpush2.msra.mxu0 0.0
  %258 = vmatprep.subr.mxu0 0.0
  %259 = vmatpush2.msra.mxu0 0.0
  %260 = vmatprep.subr.mxu0 0.0
  %261 = vmatpush2.msra.mxu0 0.0
  %262 = vmatprep.subr.mxu0 0.0
  %263 = vmatpush2.msra.mxu0 0.0
  %264 = vmatprep.subr.mxu0 0.0
  %265 = vmatpush2.msra.mxu0 0.0
  %266 = vmatprep.subr.mxu0 0.0
  %267 = vmatpush2.msra.mxu0 0.0
  %268 = vmatprep.subr.mxu0 0.0
  %269 = vmatpush2.msra.mxu0 0.0
  %270 = vmatprep.subr.mxu0 0.0
  %271 = vmatpush2.msra.mxu0 0.0
  %272 = vmatprep.subr.mxu0 0.0
  %273 = vmatpush2.msra.mxu0 0.0
  %274 = vmatprep.subr.mxu0 0.0
  %275 = vmatpush2.msra.mxu0 0.0
  %276 = vmatprep.subr.mxu0 0.0
  %277 = vmatpush2.msra.mxu0 0.0
  %278 = vmatprep.subr.mxu0 0.0
  %279 = vmatpush2.msra.mxu0 0.0
  %280 = vmatprep.subr.mxu0 0.0
  %281 = vmatpush2.msra.mxu0 0.0
  %282 = vmatprep.mubr.f32.mxu0 0.0
  %283 = vmatmul.mubr.f32.gmra.mxu0 %v216
  %v284 = vpop.f32.mrf.mxu0
  %v285 = vadd.f32 %v213, %v284
  %v286 = vpop.f32.mrf.mxu0
  %287 = vdwg.mxu0
  %288 = vst [vmem:[%s7] sm:$0xff] %v285
  // Predicated region
  $region30: #{normal_nn_forward.1} parent=0 // pred_check
    _
  $region31: #{normal_nn_forward.1} parent=0 // pred_check_branch
    %290 = sbr.rel (0) target = $region33
  $region32: #{normal_nn_forward.1} parent=0 // pred_region
    _
  $region33: #{normal_nn_forward.1} parent=0 // pred_fallthru
    _
  // Predicated region
  $region34: #{normal_nn_forward.1} parent=0 // pred_check
    _
  $region35: #{normal_nn_forward.1} parent=0 // pred_check_branch
    %292 = sbr.rel (0) target = $region37
  $region36: #{normal_nn_forward.1} parent=0 // pred_region
    _
  $region37: #{normal_nn_forward.1} parent=0 // pred_fallthru
    _

</llo_original>
